<compile_context>
chip_gen: v6e
topology: v6e:2x2x1
jax: 0.10.0
libtpu: 0.0.40
codegen_flags: <defaults>
</compile_context>

<pallas_src>
import jax
import jax.numpy as jnp
from jax import lax
from jax.experimental import pallas as pl
from jax.experimental.pallas import tpu as pltpu

LEAKY_SLOPE = 0.01            # PyTorch nn.LeakyReLU default
NORM_EPS = 1e-12              # PyTorch F.normalize default eps
PAD_OUT = 8                   # final 3-row layer zero-padded to 8 rows
LANE = 128                    # lane width; camera tile must be a multiple
DEFAULT_TILE_N = 2048         # camera (lane) tile for large N
COMPUTE_DTYPE = jnp.bfloat16  # storage/compute dtype for layers 1-2


def _leaky_relu(x):
    # 2 VALU ops (mul + max) instead of cmp+mul+select; identical for slope=0.01.
    return jnp.maximum(x, LEAKY_SLOPE * x)


def _cdiv(a, b):
    return (a + b - 1) // b


def _round_up(x, m):
    return _cdiv(x, m) * m


# ----------------------------------------------------------------------------
# Kernel: transposed MLP, cameras in lanes.
#   lat_ref : (128, TILE_N) bf16
#   w1t     : (128, 128) bf16   b1t : (128, 1) f32
#   w2t     : ( 64, 128) bf16   b2t : ( 64, 1) f32
#   w3t     : ( 16,  64) f32    b3t : ( 16, 1) f32
#   w4t     : (  8,  16) f32    b4t : (  8, 1) f32  (rows 3.. are zero)
#   out_ref : (  8, TILE_N) f32
# ----------------------------------------------------------------------------
def camera_mlp_kernel(lat_ref,
                      w1_ref, b1_ref,
                      w2_ref, b2_ref,
                      w3_ref, b3_ref,
                      w4_ref, b4_ref,
                      out_ref):
    cd = w1_ref.dtype                                        # bf16
    x = lat_ref[...]                                         # (128, T) bf16

    h = jnp.dot(w1_ref[...], x, preferred_element_type=jnp.float32)
    h = _leaky_relu(h + b1_ref[...])                         # (128, T) f32

    h = jnp.dot(w2_ref[...], h.astype(cd),
                preferred_element_type=jnp.float32)
    h = _leaky_relu(h + b2_ref[...])                         # (64, T) f32

    h = jnp.dot(w3_ref[...], h, preferred_element_type=jnp.float32)
    h = _leaky_relu(h + b3_ref[...])                         # (16, T) f32

    y = jnp.dot(w4_ref[...], h, preferred_element_type=jnp.float32)
    y = y + b4_ref[...]                                      # (8, T) f32; rows 3.. == 0

    # F.normalize(p=2, dim=1): 1/max(||y||, eps) == rsqrt(max(||y||^2, eps^2)).
    sq = jnp.sum(y * y, axis=0, keepdims=True)               # (1, T), cheap 8-sublane reduce
    inv = lax.rsqrt(jnp.maximum(sq, NORM_EPS * NORM_EPS))    # EUP, otherwise idle
    out_ref[...] = y * inv


# ----------------------------------------------------------------------------
# One-time parameter packing (hoisted out of the per-call forward).
# ----------------------------------------------------------------------------
def prepack_params(params, *, tile_n=DEFAULT_TILE_N, compute_dtype=COMPUTE_DTYPE):
    lat = params["camera_latent"]                            # (N, 128) f32
    n, d_lat = lat.shape

    # Lane tile: multiple of 128, capped so the grid has >= 2 steps when N
    # permits (lets "parallel" actually use both v7x TensorCores).
    tn = int(max(LANE, min(int(tile_n), _round_up(_cdiv(n, 2), LANE))))
    n_pad = _round_up(n, tn)

    lat_t = jnp.zeros((d_lat, n_pad), compute_dtype)
    lat_t = lat_t.at[:, :n].set(lat.T.astype(compute_dtype))

    w4 = params["w4"]                                        # (16, 3)
    b4 = params["b4"]                                        # (1, 3)
    w4t = jnp.zeros((PAD_OUT, w4.shape[0]), jnp.float32).at[:3, :].set(
        w4.T.astype(jnp.float32))
    b4t = jnp.zeros((PAD_OUT, 1), jnp.float32).at[:3, :].set(
        b4.T.astype(jnp.float32))

    return {
        "n": n, "n_pad": n_pad, "tile_n": tn,
        "lat_t": lat_t,
        "w1t": params["w1"].T.astype(compute_dtype),         # (128, 128) bf16
        "b1t": params["b1"].T.astype(jnp.float32),           # (128, 1)
        "w2t": params["w2"].T.astype(compute_dtype),         # ( 64, 128) bf16
        "b2t": params["b2"].T.astype(jnp.float32),           # ( 64, 1)
        "w3t": params["w3"].T.astype(jnp.float32),           # ( 16,  64) f32
        "b3t": params["b3"].T.astype(jnp.float32),           # ( 16, 1)
        "w4t": w4t,                                          # (  8,  16) f32
        "b4t": b4t,                                          # (  8, 1)
    }


# ----------------------------------------------------------------------------
# Forward: per-call work is just the pallas_call + tiny slice/transpose.
# ----------------------------------------------------------------------------
def camera_module_forward(packed):
    n, n_pad, tn = packed["n"], packed["n_pad"], packed["tile_n"]
    lat_t = packed["lat_t"]
    d_lat = lat_t.shape[0]

    weights = (packed["w1t"], packed["b1t"],
               packed["w2t"], packed["b2t"],
               packed["w3t"], packed["b3t"],
               packed["w4t"], packed["b4t"])

    grid = (n_pad // tn,)

    # Constant block index -> block stays VMEM-resident across grid steps.
    def resident(arr):
        return pl.BlockSpec(arr.shape, lambda i: (0, 0))

    weight_bytes = sum(int(a.size) * a.dtype.itemsize for a in weights)
    cost = pl.CostEstimate(
        flops=2 * n_pad * (128 * 128 + 128 * 64 + 64 * 16 + 16 * PAD_OUT),
        transcendentals=n_pad,
        bytes_accessed=n_pad * (d_lat * lat_t.dtype.itemsize + PAD_OUT * 4)
                       + weight_bytes,
    )

    out_t = pl.pallas_call(
        camera_mlp_kernel,
        out_shape=jax.ShapeDtypeStruct((PAD_OUT, n_pad), jnp.float32),
        grid_spec=pltpu.PrefetchScalarGridSpec(
            num_scalar_prefetch=0,
            grid=grid,
            in_specs=[
                pl.BlockSpec((d_lat, tn), lambda i: (0, i)),  # latent: tiled along lanes
                resident(packed["w1t"]), resident(packed["b1t"]),
                resident(packed["w2t"]), resident(packed["b2t"]),
                resident(packed["w3t"]), resident(packed["b3t"]),
                resident(packed["w4t"]), resident(packed["b4t"]),
            ],
            out_specs=pl.BlockSpec((PAD_OUT, tn), lambda i: (0, i)),
        ),
        compiler_params=pltpu.CompilerParams(
            dimension_semantics=("parallel",),   # v7x megacore sharding
        ),
        cost_estimate=cost,
    )(lat_t, *weights)

    return out_t[:3, :n].T                                   # (N, 3) f32


# ----------------------------------------------------------------------------
# Parameter init + references.
# ----------------------------------------------------------------------------
def init_params(key, num_cameras):
    """Deterministic synthetic parameters matching CameraModule shapes."""
    ks = jax.random.split(key, 9)

    def lin(kw, kb, fan_in, fan_out):
        bound = 1.0 / jnp.sqrt(jnp.asarray(fan_in, jnp.float32))
        w = jax.random.uniform(kw, (fan_in, fan_out), jnp.float32, -bound, bound)
        b = jax.random.uniform(kb, (1, fan_out), jnp.float32, -bound, bound)
        return w, b

    camera_latent = jax.random.normal(ks[0], (num_cameras, 128), jnp.float32)
    w1, b1 = lin(ks[1], ks[2], 128, 128)
    w2, b2 = lin(ks[3], ks[4], 128, 64)
    w3, b3 = lin(ks[5], ks[6], 64, 16)
    w4, b4 = lin(ks[7], ks[8], 16, 3)

    return {"camera_latent": camera_latent,
            "w1": w1, "b1": b1, "w2": w2, "b2": b2,
            "w3": w3, "b3": b3, "w4": w4, "b4": b4}


def reference_forward_f32(params):
    """Pure f32 reference == the true PyTorch CameraModule semantics."""
    x = params["camera_latent"]
    h = _leaky_relu(x @ params["w1"] + params["b1"])
    h = _leaky_relu(h @ params["w2"] + params["b2"])
    h = _leaky_relu(h @ params["w3"] + params["b3"])
    y = h @ params["w4"] + params["b4"]
    norm = jnp.maximum(jnp.linalg.norm(y, axis=1, keepdims=True), NORM_EPS)
    return y / norm, y


def reference_forward_mixed(params, compute_dtype=COMPUTE_DTYPE):
    """Reference mirroring the kernel's dtype flow (bf16 layers 1-2, f32 3-4)."""
    cd = compute_dtype
    x = params["camera_latent"].astype(cd)
    h = _leaky_relu(jnp.dot(x, params["w1"].astype(cd),
                            preferred_element_type=jnp.float32) + params["b1"])
    h = _leaky_relu(jnp.dot(h.astype(cd), params["w2"].astype(cd),
                            preferred_element_type=jnp.float32) + params["b2"])
    h = _leaky_relu(jnp.dot(h, params["w3"],
                            preferred_element_type=jnp.float32) + params["b3"])
    y = jnp.dot(h, params["w4"], preferred_element_type=jnp.float32) + params["b4"]
    norm = jnp.maximum(jnp.linalg.norm(y, axis=1, keepdims=True), NORM_EPS)
    return y / norm


if __name__ == "__main__":
    for num_cameras in (8, 300):
        params = init_params(jax.random.PRNGKey(0), num_cameras)
        packed = prepack_params(params)          # one-time prep (tile cap for v7x inside)
        out = jax.block_until_ready(camera_module_forward(packed))
        assert out.shape == (num_cameras, 3), out.shape
        assert bool(jnp.all(jnp.isfinite(out)))
        # Every output row must be unit-norm (F.normalize semantics).
        assert bool(jnp.all(jnp.abs(jnp.linalg.norm(out, axis=1) - 1.0) < 1e-2))

        ref_f32, y_f32 = reference_forward_f32(params)
        ref_mixed = reference_forward_mixed(params)
        # Skip rows where ||y|| is tiny: L2-normalizing a near-zero 3-vector
        # amplifies rounding noise into direction changes for any dtype flow.
        ok = (jnp.linalg.norm(y_f32, axis=1) > 0.1)[:, None]
        assert bool(jnp.any(ok))
        err_mixed = float(jnp.max(jnp.where(ok, jnp.abs(out - ref_mixed), 0.0)))
        err_f32 = float(jnp.max(jnp.where(ok, jnp.abs(out - ref_f32), 0.0)))
        assert err_mixed < 2e-2, f"mismatch vs mixed-precision reference: {err_mixed}"
        assert err_f32 < 5e-2, f"mismatch vs f32 PyTorch-semantics reference: {err_f32}"

    print("KERNEL_OK")
</pallas_src>

<mosaic_0001>
module attributes {stable_mosaic.version = 11 : i64} {
  func.func @camera_mlp_kernel(%arg0: i32, %arg1: memref<128x128xbf16, #tpu.memory_space<vmem>>, %arg2: memref<128x128xbf16, #tpu.memory_space<vmem>>, %arg3: memref<128x1xf32, #tpu.memory_space<vmem>>, %arg4: memref<64x128xbf16, #tpu.memory_space<vmem>>, %arg5: memref<64x1xf32, #tpu.memory_space<vmem>>, %arg6: memref<16x64xf32, #tpu.memory_space<vmem>>, %arg7: memref<16x1xf32, #tpu.memory_space<vmem>>, %arg8: memref<8x16xf32, #tpu.memory_space<vmem>>, %arg9: memref<8x1xf32, #tpu.memory_space<vmem>>, %arg10: memref<8x128xf32, #tpu.memory_space<vmem>>) attributes {dimension_semantics = [#tpu.dimension_semantics<parallel>], iteration_bounds = array<i64: 1>, scalar_prefetch = 0 : i64, scratch_operands = 0 : i64, tpu.core_type = #tpu.core_type<tc>, window_params = [{transform_indices = @transform_0, window_bounds = array<i64: 128, 128>}, {pipeline_mode = #tpu.pipeline_mode<synchronous>, transform_indices = @transform_1, window_bounds = array<i64: 128, 128>}, {pipeline_mode = #tpu.pipeline_mode<synchronous>, transform_indices = @transform_2, window_bounds = array<i64: 128, 1>}, {pipeline_mode = #tpu.pipeline_mode<synchronous>, transform_indices = @transform_3, window_bounds = array<i64: 64, 128>}, {pipeline_mode = #tpu.pipeline_mode<synchronous>, transform_indices = @transform_4, window_bounds = array<i64: 64, 1>}, {pipeline_mode = #tpu.pipeline_mode<synchronous>, transform_indices = @transform_5, window_bounds = array<i64: 16, 64>}, {pipeline_mode = #tpu.pipeline_mode<synchronous>, transform_indices = @transform_6, window_bounds = array<i64: 16, 1>}, {pipeline_mode = #tpu.pipeline_mode<synchronous>, transform_indices = @transform_7, window_bounds = array<i64: 8, 16>}, {pipeline_mode = #tpu.pipeline_mode<synchronous>, transform_indices = @transform_8, window_bounds = array<i64: 8, 1>}, {transform_indices = @transform_9, window_bounds = array<i64: 8, 128>}]} {
    %c0 = arith.constant 0 : index
    %c0_0 = arith.constant 0 : index
    %0 = vector.load %arg1[%c0, %c0_0] : memref<128x128xbf16, #tpu.memory_space<vmem>>, vector<128x128xbf16>
    %c0_1 = arith.constant 0 : index
    %c0_2 = arith.constant 0 : index
    %1 = vector.load %arg2[%c0_1, %c0_2] : memref<128x128xbf16, #tpu.memory_space<vmem>>, vector<128x128xbf16>
    %cst = arith.constant dense<0.000000e+00> : vector<128x128xf32>
    %2 = tpu.matmul %1, %0, %cst {dimension_numbers = #tpu.dot_dimension_numbers<[1], [0], [0], [1], [0, 0, 1, 1], [], []>} : vector<128x128xbf16>, vector<128x128xbf16>, vector<128x128xf32> -> vector<128x128xf32>
    %c0_3 = arith.constant 0 : index
    %c0_4 = arith.constant 0 : index
    %3 = vector.load %arg3[%c0_3, %c0_4] : memref<128x1xf32, #tpu.memory_space<vmem>>, vector<128x1xf32>
    %4 = vector.broadcast %3 : vector<128x1xf32> to vector<128x128xf32>
    %5 = arith.addf %2, %4 : vector<128x128xf32>
    %cst_5 = arith.constant 0.00999999977 : f32
    %6 = vector.broadcast %cst_5 : f32 to vector<128x128xf32>
    %7 = arith.mulf %6, %5 : vector<128x128xf32>
    %8 = arith.maximumf %5, %7 : vector<128x128xf32>
    %c0_6 = arith.constant 0 : index
    %c0_7 = arith.constant 0 : index
    %9 = vector.load %arg4[%c0_6, %c0_7] : memref<64x128xbf16, #tpu.memory_space<vmem>>, vector<64x128xbf16>
    %10 = arith.truncf %8 : vector<128x128xf32> to vector<128x128xbf16>
    %cst_8 = arith.constant dense<0.000000e+00> : vector<64x128xf32>
    %11 = tpu.matmul %9, %10, %cst_8 {dimension_numbers = #tpu.dot_dimension_numbers<[1], [0], [0], [1], [0, 0, 1, 1], [], []>} : vector<64x128xbf16>, vector<128x128xbf16>, vector<64x128xf32> -> vector<64x128xf32>
    %c0_9 = arith.constant 0 : index
    %c0_10 = arith.constant 0 : index
    %12 = vector.load %arg5[%c0_9, %c0_10] : memref<64x1xf32, #tpu.memory_space<vmem>>, vector<64x1xf32>
    %13 = vector.broadcast %12 : vector<64x1xf32> to vector<64x128xf32>
    %14 = arith.addf %11, %13 : vector<64x128xf32>
    %cst_11 = arith.constant 0.00999999977 : f32
    %15 = vector.broadcast %cst_11 : f32 to vector<64x128xf32>
    %16 = arith.mulf %15, %14 : vector<64x128xf32>
    %17 = arith.maximumf %14, %16 : vector<64x128xf32>
    %c0_12 = arith.constant 0 : index
    %c0_13 = arith.constant 0 : index
    %18 = vector.load %arg6[%c0_12, %c0_13] : memref<16x64xf32, #tpu.memory_space<vmem>>, vector<16x64xf32>
    %cst_14 = arith.constant dense<0.000000e+00> : vector<16x128xf32>
    %19 = tpu.matmul %18, %17, %cst_14 {dimension_numbers = #tpu.dot_dimension_numbers<[1], [0], [0], [1], [0, 0, 1, 1], [], []>} : vector<16x64xf32>, vector<64x128xf32>, vector<16x128xf32> -> vector<16x128xf32>
    %c0_15 = arith.constant 0 : index
    %c0_16 = arith.constant 0 : index
    %20 = vector.load %arg7[%c0_15, %c0_16] : memref<16x1xf32, #tpu.memory_space<vmem>>, vector<16x1xf32>
    %21 = vector.broadcast %20 : vector<16x1xf32> to vector<16x128xf32>
    %22 = arith.addf %19, %21 : vector<16x128xf32>
    %cst_17 = arith.constant 0.00999999977 : f32
    %23 = vector.broadcast %cst_17 : f32 to vector<16x128xf32>
    %24 = arith.mulf %23, %22 : vector<16x128xf32>
    %25 = arith.maximumf %22, %24 : vector<16x128xf32>
    %c0_18 = arith.constant 0 : index
    %c0_19 = arith.constant 0 : index
    %26 = vector.load %arg8[%c0_18, %c0_19] : memref<8x16xf32, #tpu.memory_space<vmem>>, vector<8x16xf32>
    %cst_20 = arith.constant dense<0.000000e+00> : vector<8x128xf32>
    %27 = tpu.matmul %26, %25, %cst_20 {dimension_numbers = #tpu.dot_dimension_numbers<[1], [0], [0], [1], [0, 0, 1, 1], [], []>} : vector<8x16xf32>, vector<16x128xf32>, vector<8x128xf32> -> vector<8x128xf32>
    %c0_21 = arith.constant 0 : index
    %c0_22 = arith.constant 0 : index
    %28 = vector.load %arg9[%c0_21, %c0_22] : memref<8x1xf32, #tpu.memory_space<vmem>>, vector<8x1xf32>
    %29 = vector.broadcast %28 : vector<8x1xf32> to vector<8x128xf32>
    %30 = arith.addf %27, %29 : vector<8x128xf32>
    %31 = arith.mulf %30, %30 : vector<8x128xf32>
    %cst_23 = arith.constant dense<0.000000e+00> : vector<128xf32>
    %32 = vector.multi_reduction <add>, %31, %cst_23 [0] : vector<8x128xf32> to vector<128xf32>
    %33 = vector.shape_cast %32 : vector<128xf32> to vector<1x128xf32>
    %cst_24 = arith.constant 1.000000e-24 : f32
    %34 = vector.broadcast %cst_24 : f32 to vector<1x128xf32>
    %35 = arith.maximumf %33, %34 : vector<1x128xf32>
    %36 = math.rsqrt %35 : vector<1x128xf32>
    %37 = vector.broadcast %36 : vector<1x128xf32> to vector<8x128xf32>
    %38 = arith.mulf %30, %37 : vector<8x128xf32>
    %c0_25 = arith.constant 0 : index
    %c0_26 = arith.constant 0 : index
    %39 = vector.load %arg10[%c0_25, %c0_26] : memref<8x128xf32, #tpu.memory_space<vmem>>, vector<8x128xf32>
    tpu.vector_store %arg10[%c0_25, %c0_26], %38 {strides = array<i32>} : memref<8x128xf32, #tpu.memory_space<vmem>>, vector<8x128xf32>,
    return
  }
  func.func @transform_0(%arg0: i32) -> (i32, i32) {
    %c0_i32 = arith.constant 0 : i32
    %c0_i32_0 = arith.constant 0 : i32
    return %c0_i32, %arg0 : i32, i32
  }
  func.func @transform_1(%arg0: i32) -> (i32, i32) {
    %c0_i32 = arith.constant 0 : i32
    %c0_i32_0 = arith.constant 0 : i32
    %c0_i32_1 = arith.constant 0 : i32
    return %c0_i32, %c0_i32_0 : i32, i32
  }
  func.func @transform_2(%arg0: i32) -> (i32, i32) {
    %c0_i32 = arith.constant 0 : i32
    %c0_i32_0 = arith.constant 0 : i32
    %c0_i32_1 = arith.constant 0 : i32
    return %c0_i32, %c0_i32_0 : i32, i32
  }
  func.func @transform_3(%arg0: i32) -> (i32, i32) {
    %c0_i32 = arith.constant 0 : i32
    %c0_i32_0 = arith.constant 0 : i32
    %c0_i32_1 = arith.constant 0 : i32
    return %c0_i32, %c0_i32_0 : i32, i32
  }
  func.func @transform_4(%arg0: i32) -> (i32, i32) {
    %c0_i32 = arith.constant 0 : i32
    %c0_i32_0 = arith.constant 0 : i32
    %c0_i32_1 = arith.constant 0 : i32
    return %c0_i32, %c0_i32_0 : i32, i32
  }
  func.func @transform_5(%arg0: i32) -> (i32, i32) {
    %c0_i32 = arith.constant 0 : i32
    %c0_i32_0 = arith.constant 0 : i32
    %c0_i32_1 = arith.constant 0 : i32
    return %c0_i32, %c0_i32_0 : i32, i32
  }
  func.func @transform_6(%arg0: i32) -> (i32, i32) {
    %c0_i32 = arith.constant 0 : i32
    %c0_i32_0 = arith.constant 0 : i32
    %c0_i32_1 = arith.constant 0 : i32
    return %c0_i32, %c0_i32_0 : i32, i32
  }
  func.func @transform_7(%arg0: i32) -> (i32, i32) {
    %c0_i32 = arith.constant 0 : i32
    %c0_i32_0 = arith.constant 0 : i32
    %c0_i32_1 = arith.constant 0 : i32
    return %c0_i32, %c0_i32_0 : i32, i32
  }
  func.func @transform_8(%arg0: i32) -> (i32, i32) {
    %c0_i32 = arith.constant 0 : i32
    %c0_i32_0 = arith.constant 0 : i32
    %c0_i32_1 = arith.constant 0 : i32
    return %c0_i32, %c0_i32_0 : i32, i32
  }
  func.func @transform_9(%arg0: i32) -> (i32, i32) {
    %c0_i32 = arith.constant 0 : i32
    %c0_i32_0 = arith.constant 0 : i32
    return %c0_i32, %arg0 : i32, i32
  }
}

</mosaic_0001>

<llo_original>
// kernel: tpu_custom_call.1
$region0: #{tpu_custom_call.1}
  #allocation0 [shape = 'u32[]', space=smem, size = 0x4, offset = 0x4, fixed_abs, tag = 'smem constant byte address 0x4 - core index']
  #allocation1 [shape = 'u32[144,128]{1,0:T(1,128)}', space=vmem, size = 0x12000, scoped, tag = 'internal scratch']
  %s0 = inlined_call_operand.vmem [shape: bf16[128,128], index: 0, kind: input, shape index: {}]
  %s1 = inlined_call_operand.vmem [shape: bf16[128,128], index: 1, kind: input, shape index: {}]
  %s2 = inlined_call_operand.vmem [shape: f32[128,1], index: 2, kind: input, shape index: {}]
  %s3 = inlined_call_operand.vmem [shape: bf16[64,128], index: 3, kind: input, shape index: {}]
  %s4 = inlined_call_operand.vmem [shape: f32[64,1], index: 4, kind: input, shape index: {}]
  %s5 = inlined_call_operand.vmem [shape: f32[16,64], index: 5, kind: input, shape index: {}]
  %s6 = inlined_call_operand.vmem [shape: f32[16,1], index: 6, kind: input, shape index: {}]
  %s7 = inlined_call_operand.vmem [shape: f32[8,16], index: 7, kind: input, shape index: {}]
  %s8 = inlined_call_operand.vmem [shape: f32[8,1], index: 8, kind: input, shape index: {}]
  %s9 = inlined_call_operand.hbm [shape: f32[8,128], index: 9, kind: output, shape index: {}]
  %s10 = sld [smem:[#allocation0]]
  $region46: #{tpu_custom_call.1} parent=0
    _
  %s12 = ssub.s32 1, %s10
  %s13 = scalar_select 0, %s12, %s10
  $region1: #{tpu_custom_call.1} parent=0
    #allocation2 [shape = 'u8[4096]{0}', space=vmem, size = 0x1000, scoped, tag = 'output window, operand 0, single buffered']
    #allocation3 [shape = 's32[1]{0}', space=sflag, size = 0x4, scoped, tag = 'scoped memory for tpu_custom_call.1']
    %14 = vsyncpa [#allocation3], 0
    // Predicated region
    $region2: #{tpu_custom_call.1} parent=1 // pred_check
      _
    $region3: #{tpu_custom_call.1} parent=1 // pred_check_branch
      %16 = sbr.rel (0) target = $region5
    $region4: #{tpu_custom_call.1} parent=1 // pred_region
      _
    $region5: #{tpu_custom_call.1} parent=1 // pred_fallthru
      _
    // Predicated region
    $region6: #{tpu_custom_call.1} parent=1 // pred_check
      _
    $region7: #{tpu_custom_call.1} parent=1 // pred_check_branch
      %18 = sbr.rel (0) target = $region9
    $region8: #{tpu_custom_call.1} parent=1 // pred_region
      _
    $region9: #{tpu_custom_call.1} parent=1 // pred_fallthru
      _
    // Predicated region
    $region10: #{tpu_custom_call.1} parent=1 // pred_check
      _
    $region11: #{tpu_custom_call.1} parent=1 // pred_check_branch
      %20 = sbr.rel (0) target = $region13
    $region12: #{tpu_custom_call.1} parent=1 // pred_region
      _
    $region13: #{tpu_custom_call.1} parent=1 // pred_fallthru
      _
    // Predicated region
    $region14: #{tpu_custom_call.1} parent=1 // pred_check
      _
    $region15: #{tpu_custom_call.1} parent=1 // pred_check_branch
      %22 = sbr.rel (0) target = $region17
    $region16: #{tpu_custom_call.1} parent=1 // pred_region
      _
    $region17: #{tpu_custom_call.1} parent=1 // pred_fallthru
      _
    // Predicated region
    $region18: #{tpu_custom_call.1} parent=1 // pred_check
      _
    $region19: #{tpu_custom_call.1} parent=1 // pred_check_branch
      %24 = sbr.rel (0) target = $region21
    $region20: #{tpu_custom_call.1} parent=1 // pred_region
      _
    $region21: #{tpu_custom_call.1} parent=1 // pred_fallthru
      _
    // Predicated region
    $region22: #{tpu_custom_call.1} parent=1 // pred_check
      _
    $region23: #{tpu_custom_call.1} parent=1 // pred_check_branch
      %26 = sbr.rel (0) target = $region25
    $region24: #{tpu_custom_call.1} parent=1 // pred_region
      _
    $region25: #{tpu_custom_call.1} parent=1 // pred_fallthru
      _
    // Predicated region
    $region26: #{tpu_custom_call.1} parent=1 // pred_check
      _
    $region27: #{tpu_custom_call.1} parent=1 // pred_check_branch
      %28 = sbr.rel (0) target = $region29
    $region28: #{tpu_custom_call.1} parent=1 // pred_region
      _
    $region29: #{tpu_custom_call.1} parent=1 // pred_fallthru
      _
    // Predicated region
    $region30: #{tpu_custom_call.1} parent=1 // pred_check
      _
    $region31: #{tpu_custom_call.1} parent=1 // pred_check_branch
      %30 = sbr.rel (0) target = $region33
    $region32: #{tpu_custom_call.1} parent=1 // pred_region
      _
    $region33: #{tpu_custom_call.1} parent=1 // pred_fallthru
      _
    // Predicated region
    $region34: #{tpu_custom_call.1} parent=1 // pred_check
      _
    $region35: #{tpu_custom_call.1} parent=1 // pred_check_branch
      %32 = sbr.rel (0) target = $region37
    $region36: #{tpu_custom_call.1} parent=1 // pred_region
      _
    $region37: #{tpu_custom_call.1} parent=1 // pred_fallthru
      _
    %v34 = vld [vmem:[%s0] sm:$0xf]
    %v35 = vld [vmem:[%s0 + $0x4] sm:$0xf]
    %v36 = vld [vmem:[%s0 + $0x8] sm:$0xf]
    %v37 = vld [vmem:[%s0 + $0xc] sm:$0xf]
    %v38 = vld [vmem:[%s0 + $0x10] sm:$0xf]
    %v39 = vld [vmem:[%s0 + $0x14] sm:$0xf]
    %v40 = vld [vmem:[%s0 + $0x18] sm:$0xf]
    %v41 = vld [vmem:[%s0 + $0x1c] sm:$0xf]
    %v42 = vld [vmem:[%s0 + $0x20] sm:$0xf]
    %v43 = vld [vmem:[%s0 + $0x24] sm:$0xf]
    %v44 = vld [vmem:[%s0 + $0x28] sm:$0xf]
    %v45 = vld [vmem:[%s0 + $0x2c] sm:$0xf]
    %v46 = vld [vmem:[%s0 + $0x30] sm:$0xf]
    %v47 = vld [vmem:[%s0 + $0x34] sm:$0xf]
    %v48 = vld [vmem:[%s0 + $0x38] sm:$0xf]
    %v49 = vld [vmem:[%s0 + $0x3c] sm:$0xf]
    %v50 = vld [vmem:[%s1] sm:$0xf]
    %v51 = vld [vmem:[%s1 + $0x4] sm:$0xf]
    %v52 = vld [vmem:[%s1 + $0x8] sm:$0xf]
    %v53 = vld [vmem:[%s1 + $0xc] sm:$0xf]
    %v54 = vld [vmem:[%s1 + $0x10] sm:$0xf]
    %v55 = vld [vmem:[%s1 + $0x14] sm:$0xf]
    %v56 = vld [vmem:[%s1 + $0x18] sm:$0xf]
    %v57 = vld [vmem:[%s1 + $0x1c] sm:$0xf]
    %v58 = vld [vmem:[%s1 + $0x20] sm:$0xf]
    %v59 = vld [vmem:[%s1 + $0x24] sm:$0xf]
    %v60 = vld [vmem:[%s1 + $0x28] sm:$0xf]
    %v61 = vld [vmem:[%s1 + $0x2c] sm:$0xf]
    %v62 = vld [vmem:[%s1 + $0x30] sm:$0xf]
    %v63 = vld [vmem:[%s1 + $0x34] sm:$0xf]
    %v64 = vld [vmem:[%s1 + $0x38] sm:$0xf]
    %v65 = vld [vmem:[%s1 + $0x3c] sm:$0xf]
    %v66 = vld [vmem:[%s2] sm:$0xff]
    %v67 = vld [vmem:[%s2 + $0x8] sm:$0xff]
    %v68 = vld [vmem:[%s2 + $0x10] sm:$0xff]
    %v69 = vld [vmem:[%s2 + $0x18] sm:$0xff]
    %v70 = vld [vmem:[%s2 + $0x20] sm:$0xff]
    %v71 = vld [vmem:[%s2 + $0x28] sm:$0xff]
    %v72 = vld [vmem:[%s2 + $0x30] sm:$0xff]
    %v73 = vld [vmem:[%s2 + $0x38] sm:$0xff]
    %v74 = vld [vmem:[%s2 + $0x40] sm:$0xff]
    %v75 = vld [vmem:[%s2 + $0x48] sm:$0xff]
    %v76 = vld [vmem:[%s2 + $0x50] sm:$0xff]
    %v77 = vld [vmem:[%s2 + $0x58] sm:$0xff]
    %v78 = vld [vmem:[%s2 + $0x60] sm:$0xff]
    %v79 = vld [vmem:[%s2 + $0x68] sm:$0xff]
    %v80 = vld [vmem:[%s2 + $0x70] sm:$0xff]
    %v81 = vld [vmem:[%s2 + $0x78] sm:$0xff]
    %83 = vset.pattern.permute.xlu0 0
    %84 = vperm.xlu0 %83, %v66
    %v85 = vpop.permute.xlu0 %84
    %88 = vset.pattern.permute.xlu0 0
    %89 = vperm.xlu0 %88, %v67
    %v90 = vpop.permute.xlu0 %89
    %93 = vset.pattern.permute.xlu0 0
    %94 = vperm.xlu0 %93, %v68
    %v95 = vpop.permute.xlu0 %94
    %98 = vset.pattern.permute.xlu0 0
    %99 = vperm.xlu0 %98, %v69
    %v100 = vpop.permute.xlu0 %99
    %103 = vset.pattern.permute.xlu0 0
    %104 = vperm.xlu0 %103, %v70
    %v105 = vpop.permute.xlu0 %104
    %108 = vset.pattern.permute.xlu0 0
    %109 = vperm.xlu0 %108, %v71
    %v110 = vpop.permute.xlu0 %109
    %113 = vset.pattern.permute.xlu0 0
    %114 = vperm.xlu0 %113, %v72
    %v115 = vpop.permute.xlu0 %114
    %118 = vset.pattern.permute.xlu0 0
    %119 = vperm.xlu0 %118, %v73
    %v120 = vpop.permute.xlu0 %119
    %123 = vset.pattern.permute.xlu0 0
    %124 = vperm.xlu0 %123, %v74
    %v125 = vpop.permute.xlu0 %124
    %128 = vset.pattern.permute.xlu0 0
    %129 = vperm.xlu0 %128, %v75
    %v130 = vpop.permute.xlu0 %129
    %133 = vset.pattern.permute.xlu0 0
    %134 = vperm.xlu0 %133, %v76
    %v135 = vpop.permute.xlu0 %134
    %138 = vset.pattern.permute.xlu0 0
    %139 = vperm.xlu0 %138, %v77
    %v140 = vpop.permute.xlu0 %139
    %143 = vset.pattern.permute.xlu0 0
    %144 = vperm.xlu0 %143, %v78
    %v145 = vpop.permute.xlu0 %144
    %148 = vset.pattern.permute.xlu0 0
    %149 = vperm.xlu0 %148, %v79
    %v150 = vpop.permute.xlu0 %149
    %153 = vset.pattern.permute.xlu0 0
    %154 = vperm.xlu0 %153, %v80
    %v155 = vpop.permute.xlu0 %154
    %158 = vset.pattern.permute.xlu0 0
    %159 = vperm.xlu0 %158, %v81
    %v160 = vpop.permute.xlu0 %159
    %v178 = vunpack.c.l.b16 %v50
    %v179 = vunpack.c.l.b16 %v51
    %v180 = vunpack.c.l.b16 %v52
    %v181 = vunpack.c.l.b16 %v53
    %v182 = vunpack.c.l.b16 %v54
    %v183 = vunpack.c.l.b16 %v55
    %v184 = vunpack.c.l.b16 %v56
    %v185 = vunpack.c.l.b16 %v57
    %v186 = vunpack.c.l.b16 %v58
    %v187 = vunpack.c.l.b16 %v59
    %v188 = vunpack.c.l.b16 %v60
    %v189 = vunpack.c.l.b16 %v61
    %v190 = vunpack.c.l.b16 %v62
    %v191 = vunpack.c.l.b16 %v63
    %v192 = vunpack.c.l.b16 %v64
    %v193 = vunpack.c.l.b16 %v65
    %v194 = vpack.c.b16 %v179, %v178
    %v195 = vpack.c.b16 %v181, %v180
    %v196 = vpack.c.b16 %v183, %v182
    %v197 = vpack.c.b16 %v185, %v184
    %v198 = vpack.c.b16 %v187, %v186
    %v199 = vpack.c.b16 %v189, %v188
    %v200 = vpack.c.b16 %v191, %v190
    %v201 = vpack.c.b16 %v193, %v192
    %v226 = vunpack.c.l.b16 %v34
    %v227 = vunpack.c.l.b16 %v35
    %v228 = vunpack.c.l.b16 %v36
    %v229 = vunpack.c.l.b16 %v37
    %v230 = vunpack.c.l.b16 %v38
    %v231 = vunpack.c.l.b16 %v39
    %v232 = vunpack.c.l.b16 %v40
    %v233 = vunpack.c.l.b16 %v41
    %v234 = vunpack.c.l.b16 %v42
    %v235 = vunpack.c.l.b16 %v43
    %v236 = vunpack.c.l.b16 %v44
    %v237 = vunpack.c.l.b16 %v45
    %v238 = vunpack.c.l.b16 %v46
    %v239 = vunpack.c.l.b16 %v47
    %v240 = vunpack.c.l.b16 %v48
    %v241 = vunpack.c.l.b16 %v49
    %v242 = vpack.c.b16 %v227, %v226
    %v243 = vpack.c.b16 %v229, %v228
    %v244 = vpack.c.b16 %v231, %v230
    %v245 = vpack.c.b16 %v233, %v232
    %v246 = vpack.c.b16 %v235, %v234
    %v247 = vpack.c.b16 %v237, %v236
    %v248 = vpack.c.b16 %v239, %v238
    %v249 = vpack.c.b16 %v241, %v240
    %258 = vmatprep.subr.bf16.mxu0 0
    %259 = vmatpush1.bf16.msra.mxu0 %v249
    %260 = vmatprep.subr.bf16.mxu0 0
    %261 = vmatpush1.bf16.msra.mxu0 %v248
    %262 = vmatprep.subr.bf16.mxu0 0
    %263 = vmatpush1.bf16.msra.mxu0 %v247
    %264 = vmatprep.subr.bf16.mxu0 0
    %265 = vmatpush1.bf16.msra.mxu0 %v246
    %266 = vmatprep.subr.bf16.mxu0 0
    %267 = vmatpush1.bf16.msra.mxu0 %v245
    %268 = vmatprep.subr.bf16.mxu0 0
    %269 = vmatpush1.bf16.msra.mxu0 %v244
    %270 = vmatprep.subr.bf16.mxu0 0
    %271 = vmatpush1.bf16.msra.mxu0 %v243
    %272 = vmatprep.subr.bf16.mxu0 0
    %273 = vmatpush1.bf16.msra.mxu0 %v242
    %274 = vmatprep.subr.bf16.mxu0 0
    %275 = vmatpush2.bf16.msra.mxu0 0
    %276 = vmatprep.subr.bf16.mxu0 0
    %277 = vmatpush2.bf16.msra.mxu0 0
    %278 = vmatprep.subr.bf16.mxu0 0
    %279 = vmatpush2.bf16.msra.mxu0 0
    %280 = vmatprep.subr.bf16.mxu0 0
    %281 = vmatpush2.bf16.msra.mxu0 0
    %282 = vmatprep.subr.bf16.mxu0 0
    %283 = vmatpush2.bf16.msra.mxu0 0
    %284 = vmatprep.subr.bf16.mxu0 0
    %285 = vmatpush2.bf16.msra.mxu0 0
    %286 = vmatprep.subr.bf16.mxu0 0
    %287 = vmatpush2.bf16.msra.mxu0 0
    %288 = vmatprep.subr.bf16.mxu0 0
    %289 = vmatpush2.bf16.msra.mxu0 0
    %290 = vmatprep.mubr.bf16.mxu0 0
    %291 = vmatmul.mubr.bf16.gmra.mxu0 %v194
    %v292 = vpop.f32.mrf.mxu0
    %v293 = vadd.f32 %v85, %v292
    %v294 = vpop.f32.mrf.mxu0
    %v295 = vpop.f32.mrf.mxu0
    %v296 = vadd.f32 %v90, %v295
    %v297 = vpop.f32.mrf.mxu0
    %298 = vmatprep.mubr.bf16.mxu0 0
    %299 = vmatmul.mubr.bf16.gmra.mxu0 %v195
    %v300 = vpop.f32.mrf.mxu0
    %v301 = vadd.f32 %v95, %v300
    %v302 = vpop.f32.mrf.mxu0
    %v303 = vpop.f32.mrf.mxu0
    %v304 = vadd.f32 %v100, %v303
    %v305 = vpop.f32.mrf.mxu0
    %306 = vmatprep.mubr.bf16.mxu0 0
    %307 = vmatmul.mubr.bf16.gmra.mxu0 %v196
    %v308 = vpop.f32.mrf.mxu0
    %v309 = vadd.f32 %v105, %v308
    %v310 = vpop.f32.mrf.mxu0
    %v311 = vpop.f32.mrf.mxu0
    %v312 = vadd.f32 %v110, %v311
    %v313 = vpop.f32.mrf.mxu0
    %314 = vmatprep.mubr.bf16.mxu0 0
    %315 = vmatmul.mubr.bf16.gmra.mxu0 %v197
    %v316 = vpop.f32.mrf.mxu0
    %v317 = vadd.f32 %v115, %v316
    %v318 = vpop.f32.mrf.mxu0
    %v319 = vpop.f32.mrf.mxu0
    %v320 = vadd.f32 %v120, %v319
    %v321 = vpop.f32.mrf.mxu0
    %322 = vmatprep.mubr.bf16.mxu0 0
    %323 = vmatmul.mubr.bf16.gmra.mxu0 %v198
    %v324 = vpop.f32.mrf.mxu0
    %v325 = vadd.f32 %v125, %v324
    %v326 = vpop.f32.mrf.mxu0
    %v327 = vpop.f32.mrf.mxu0
    %v328 = vadd.f32 %v130, %v327
    %v329 = vpop.f32.mrf.mxu0
    %330 = vmatprep.mubr.bf16.mxu0 0
    %331 = vmatmul.mubr.bf16.gmra.mxu0 %v199
    %v332 = vpop.f32.mrf.mxu0
    %v333 = vadd.f32 %v135, %v332
    %v334 = vpop.f32.mrf.mxu0
    %v335 = vpop.f32.mrf.mxu0
    %v336 = vadd.f32 %v140, %v335
    %v337 = vpop.f32.mrf.mxu0
    %338 = vmatprep.mubr.bf16.mxu0 0
    %339 = vmatmul.mubr.bf16.gmra.mxu0 %v200
    %v340 = vpop.f32.mrf.mxu0
    %v341 = vadd.f32 %v145, %v340
    %v342 = vpop.f32.mrf.mxu0
    %v343 = vpop.f32.mrf.mxu0
    %v344 = vadd.f32 %v150, %v343
    %v345 = vpop.f32.mrf.mxu0
    %346 = vmatprep.mubr.bf16.mxu0 0
    %347 = vmatmul.mubr.bf16.gmra.mxu0 %v201
    %v348 = vpop.f32.mrf.mxu0
    %v349 = vadd.f32 %v155, %v348
    %v350 = vpop.f32.mrf.mxu0
    %v351 = vpop.f32.mrf.mxu0
    %v352 = vadd.f32 %v160, %v351
    %v353 = vpop.f32.mrf.mxu0
    %354 = vdwg.mxu0
    %v355 = vmul.f32 %v293, 0.01
    %v356 = vmul.f32 %v296, 0.01
    %v357 = vmul.f32 %v301, 0.01
    %v358 = vmul.f32 %v304, 0.01
    %v359 = vmul.f32 %v309, 0.01
    %v360 = vmul.f32 %v312, 0.01
    %v361 = vmul.f32 %v317, 0.01
    %v362 = vmul.f32 %v320, 0.01
    %v363 = vmul.f32 %v325, 0.01
    %v364 = vmul.f32 %v328, 0.01
    %v365 = vmul.f32 %v333, 0.01
    %v366 = vmul.f32 %v336, 0.01
    %v367 = vmul.f32 %v341, 0.01
    %v368 = vmul.f32 %v344, 0.01
    %v369 = vmul.f32 %v349, 0.01
    %v370 = vmul.f32 %v352, 0.01
    %v371 = vmax.f32 %v293, %v355
    %v372 = vmax.f32 %v296, %v356
    %v373 = vmax.f32 %v301, %v357
    %v374 = vmax.f32 %v304, %v358
    %v375 = vmax.f32 %v309, %v359
    %v376 = vmax.f32 %v312, %v360
    %v377 = vmax.f32 %v317, %v361
    %v378 = vmax.f32 %v320, %v362
    %v379 = vmax.f32 %v325, %v363
    %v380 = vmax.f32 %v328, %v364
    %v381 = vmax.f32 %v333, %v365
    %v382 = vmax.f32 %v336, %v366
    %v383 = vmax.f32 %v341, %v367
    %v384 = vmax.f32 %v344, %v368
    %v385 = vmax.f32 %v349, %v369
    %v386 = vmax.f32 %v352, %v370
    %v387 = vld [vmem:[%s3] sm:$0xf]
    %v388 = vld [vmem:[%s3 + $0x4] sm:$0xf]
    %v389 = vld [vmem:[%s3 + $0x8] sm:$0xf]
    %v390 = vld [vmem:[%s3 + $0xc] sm:$0xf]
    %v391 = vld [vmem:[%s3 + $0x10] sm:$0xf]
    %v392 = vld [vmem:[%s3 + $0x14] sm:$0xf]
    %v393 = vld [vmem:[%s3 + $0x18] sm:$0xf]
    %v394 = vld [vmem:[%s3 + $0x1c] sm:$0xf]
    %v395 = vpack.c.bf16 %v372, %v371
    %v396 = vpack.c.bf16 %v374, %v373
    %v397 = vpack.c.bf16 %v376, %v375
    %v398 = vpack.c.bf16 %v378, %v377
    %v399 = vpack.c.bf16 %v380, %v379
    %v400 = vpack.c.bf16 %v382, %v381
    %v401 = vpack.c.bf16 %v384, %v383
    %v402 = vpack.c.bf16 %v386, %v385
    %v403 = vld [vmem:[%s4] sm:$0xff]
    %v404 = vld [vmem:[%s4 + $0x8] sm:$0xff]
    %v405 = vld [vmem:[%s4 + $0x10] sm:$0xff]
    %v406 = vld [vmem:[%s4 + $0x18] sm:$0xff]
    %v407 = vld [vmem:[%s4 + $0x20] sm:$0xff]
    %v408 = vld [vmem:[%s4 + $0x28] sm:$0xff]
    %v409 = vld [vmem:[%s4 + $0x30] sm:$0xff]
    %v410 = vld [vmem:[%s4 + $0x38] sm:$0xff]
    %412 = vset.pattern.permute.xlu0 0
    %413 = vperm.xlu0 %412, %v403
    %v414 = vpop.permute.xlu0 %413
    %417 = vset.pattern.permute.xlu0 0
    %418 = vperm.xlu0 %417, %v404
    %v419 = vpop.permute.xlu0 %418
    %422 = vset.pattern.permute.xlu0 0
    %423 = vperm.xlu0 %422, %v405
    %v424 = vpop.permute.xlu0 %423
    %427 = vset.pattern.permute.xlu0 0
    %428 = vperm.xlu0 %427, %v406
    %v429 = vpop.permute.xlu0 %428
    %432 = vset.pattern.permute.xlu0 0
    %433 = vperm.xlu0 %432, %v407
    %v434 = vpop.permute.xlu0 %433
    %437 = vset.pattern.permute.xlu0 0
    %438 = vperm.xlu0 %437, %v408
    %v439 = vpop.permute.xlu0 %438
    %442 = vset.pattern.permute.xlu0 0
    %443 = vperm.xlu0 %442, %v409
    %v444 = vpop.permute.xlu0 %443
    %447 = vset.pattern.permute.xlu0 0
    %448 = vperm.xlu0 %447, %v410
    %v449 = vpop.permute.xlu0 %448
    %v459 = vunpack.c.l.b16 %v387
    %v460 = vunpack.c.l.b16 %v388
    %v461 = vunpack.c.l.b16 %v389
    %v462 = vunpack.c.l.b16 %v390
    %v463 = vunpack.c.l.b16 %v391
    %v464 = vunpack.c.l.b16 %v392
    %v465 = vunpack.c.l.b16 %v393
    %v466 = vunpack.c.l.b16 %v394
    %v467 = vpack.c.b16 %v460, %v459
    %v468 = vpack.c.b16 %v462, %v461
    %v469 = vpack.c.b16 %v464, %v463
    %v470 = vpack.c.b16 %v466, %v465
    %475 = vmatprep.subr.bf16.mxu0 0
    %476 = vmatpush1.bf16.msra.mxu0 %v402
    %477 = vmatprep.subr.bf16.mxu0 0
    %478 = vmatpush1.bf16.msra.mxu0 %v401
    %479 = vmatprep.subr.bf16.mxu0 0
    %480 = vmatpush1.bf16.msra.mxu0 %v400
    %481 = vmatprep.subr.bf16.mxu0 0
    %482 = vmatpush1.bf16.msra.mxu0 %v399
    %483 = vmatprep.subr.bf16.mxu0 0
    %484 = vmatpush1.bf16.msra.mxu0 %v398
    %485 = vmatprep.subr.bf16.mxu0 0
    %486 = vmatpush1.bf16.msra.mxu0 %v397
    %487 = vmatprep.subr.bf16.mxu0 0
    %488 = vmatpush1.bf16.msra.mxu0 %v396
    %489 = vmatprep.subr.bf16.mxu0 0
    %490 = vmatpush1.bf16.msra.mxu0 %v395
    %491 = vmatprep.subr.bf16.mxu0 0
    %492 = vmatpush2.bf16.msra.mxu0 0
    %493 = vmatprep.subr.bf16.mxu0 0
    %494 = vmatpush2.bf16.msra.mxu0 0
    %495 = vmatprep.subr.bf16.mxu0 0
    %496 = vmatpush2.bf16.msra.mxu0 0
    %497 = vmatprep.subr.bf16.mxu0 0
    %498 = vmatpush2.bf16.msra.mxu0 0
    %499 = vmatprep.subr.bf16.mxu0 0
    %500 = vmatpush2.bf16.msra.mxu0 0
    %501 = vmatprep.subr.bf16.mxu0 0
    %502 = vmatpush2.bf16.msra.mxu0 0
    %503 = vmatprep.subr.bf16.mxu0 0
    %504 = vmatpush2.bf16.msra.mxu0 0
    %505 = vmatprep.subr.bf16.mxu0 0
    %506 = vmatpush2.bf16.msra.mxu0 0
    %507 = vmatprep.mubr.bf16.mxu0 0
    %508 = vmatmul.mubr.bf16.gmra.mxu0 %v467
    %v509 = vpop.f32.mrf.mxu0
    %v510 = vadd.f32 %v414, %v509
    %v511 = vpop.f32.mrf.mxu0
    %v512 = vpop.f32.mrf.mxu0
    %v513 = vadd.f32 %v419, %v512
    %v514 = vpop.f32.mrf.mxu0
    %515 = vmatprep.mubr.bf16.mxu0 0
    %516 = vmatmul.mubr.bf16.gmra.mxu0 %v468
    %v517 = vpop.f32.mrf.mxu0
    %v518 = vadd.f32 %v424, %v517
    %v519 = vpop.f32.mrf.mxu0
    %v520 = vpop.f32.mrf.mxu0
    %v521 = vadd.f32 %v429, %v520
    %v522 = vpop.f32.mrf.mxu0
    %523 = vmatprep.mubr.bf16.mxu0 0
    %524 = vmatmul.mubr.bf16.gmra.mxu0 %v469
    %v525 = vpop.f32.mrf.mxu0
    %v526 = vadd.f32 %v434, %v525
    %v527 = vpop.f32.mrf.mxu0
    %v528 = vpop.f32.mrf.mxu0
    %v529 = vadd.f32 %v439, %v528
    %v530 = vpop.f32.mrf.mxu0
    %531 = vmatprep.mubr.bf16.mxu0 0
    %532 = vmatmul.mubr.bf16.gmra.mxu0 %v470
    %v533 = vpop.f32.mrf.mxu0
    %v534 = vadd.f32 %v444, %v533
    %v535 = vpop.f32.mrf.mxu0
    %v536 = vpop.f32.mrf.mxu0
    %v537 = vadd.f32 %v449, %v536
    %v538 = vpop.f32.mrf.mxu0
    %539 = vdwg.mxu0
    %v540 = vmul.f32 %v510, 0.01
    %v541 = vmul.f32 %v513, 0.01
    %v542 = vmul.f32 %v518, 0.01
    %v543 = vmul.f32 %v521, 0.01
    %v544 = vmul.f32 %v526, 0.01
    %v545 = vmul.f32 %v529, 0.01
    %v546 = vmul.f32 %v534, 0.01
    %v547 = vmul.f32 %v537, 0.01
    %v548 = vmax.f32 %v510, %v540
    %v549 = vmax.f32 %v513, %v541
    %v550 = vmax.f32 %v518, %v542
    %v551 = vmax.f32 %v521, %v543
    %v552 = vmax.f32 %v526, %v544
    %v553 = vmax.f32 %v529, %v545
    %v554 = vmax.f32 %v534, %v546
    %v555 = vmax.f32 %v537, %v547
    %v556 = vld [vmem:[%s5] sm:$0xff]
    %v557 = vld [vmem:[%s5 + $0x8] sm:$0xff]
    %v558 = vld [vmem:[%s6] sm:$0xff]
    %v559 = vld [vmem:[%s6 + $0x8] sm:$0xff]
    %561 = vset.pattern.permute.xlu0 0
    %562 = vperm.xlu0 %561, %v558
    %v563 = vpop.permute.xlu0 %562
    %566 = vset.pattern.permute.xlu0 0
    %567 = vperm.xlu0 %566, %v559
    %v568 = vpop.permute.xlu0 %567
    %vm570 = vcmask 523264
    %v572 = vsel %vm570, %v556, 0
    %v575 = vsel %vm570, %v557, 0
    %577 = vmatprep.subr.mxu0 0.0
    %578 = vmatpush1.msra.mxu0 0.0
    %579 = vmatprep.subr.mxu0 0.0
    %580 = vmatpush1.msra.mxu0 0.0
    %581 = vmatprep.subr.mxu0 0.0
    %582 = vmatpush1.msra.mxu0 0.0
    %583 = vmatprep.subr.mxu0 0.0
    %584 = vmatpush1.msra.mxu0 0.0
    %585 = vmatprep.subr.mxu0 0.0
    %586 = vmatpush1.msra.mxu0 0.0
    %587 = vmatprep.subr.mxu0 0.0
    %588 = vmatpush1.msra.mxu0 0.0
    %589 = vmatprep.subr.mxu0 0.0
    %590 = vmatpush1.msra.mxu0 0.0
    %591 = vmatprep.subr.mxu0 0.0
    %592 = vmatpush1.msra.mxu0 0.0
    %593 = vmatprep.subr.mxu0 0.0
    %594 = vmatpush1.msra.mxu0 %v555
    %595 = vmatprep.subr.mxu0 0.0
    %596 = vmatpush1.msra.mxu0 %v554
    %597 = vmatprep.subr.mxu0 0.0
    %598 = vmatpush1.msra.mxu0 %v553
    %599 = vmatprep.subr.mxu0 0.0
    %600 = vmatpush1.msra.mxu0 %v552
    %601 = vmatprep.subr.mxu0 0.0
    %602 = vmatpush1.msra.mxu0 %v551
    %603 = vmatprep.subr.mxu0 0.0
    %604 = vmatpush1.msra.mxu0 %v550
    %605 = vmatprep.subr.mxu0 0.0
    %606 = vmatpush1.msra.mxu0 %v549
    %607 = vmatprep.subr.mxu0 0.0
    %608 = vmatpush1.msra.mxu0 %v548
    %609 = vmatprep.subr.mxu0 0.0
    %610 = vmatpush2.msra.mxu0 0.0
    %611 = vmatprep.subr.mxu0 0.0
    %612 = vmatpush2.msra.mxu0 0.0
    %613 = vmatprep.subr.mxu0 0.0
    %614 = vmatpush2.msra.mxu0 0.0
    %615 = vmatprep.subr.mxu0 0.0
    %616 = vmatpush2.msra.mxu0 0.0
    %617 = vmatprep.subr.mxu0 0.0
    %618 = vmatpush2.msra.mxu0 0.0
    %619 = vmatprep.subr.mxu0 0.0
    %620 = vmatpush2.msra.mxu0 0.0
    %621 = vmatprep.subr.mxu0 0.0
    %622 = vmatpush2.msra.mxu0 0.0
    %623 = vmatprep.subr.mxu0 0.0
    %624 = vmatpush2.msra.mxu0 0.0
    %625 = vmatprep.subr.mxu0 0.0
    %626 = vmatpush2.msra.mxu0 0.0
    %627 = vmatprep.subr.mxu0 0.0
    %628 = vmatpush2.msra.mxu0 0.0
    %629 = vmatprep.subr.mxu0 0.0
    %630 = vmatpush2.msra.mxu0 0.0
    %631 = vmatprep.subr.mxu0 0.0
    %632 = vmatpush2.msra.mxu0 0.0
    %633 = vmatprep.subr.mxu0 0.0
    %634 = vmatpush2.msra.mxu0 0.0
    %635 = vmatprep.subr.mxu0 0.0
    %636 = vmatpush2.msra.mxu0 0.0
    %637 = vmatprep.subr.mxu0 0.0
    %638 = vmatpush2.msra.mxu0 0.0
    %639 = vmatprep.subr.mxu0 0.0
    %640 = vmatpush2.msra.mxu0 0.0
    %641 = vmatprep.mubr.f32.mxu0 0.0
    %642 = vmatmul.mubr.f32.gmra.mxu0 %v572
    %v643 = vpop.f32.mrf.mxu0
    %v644 = vadd.f32 %v563, %v643
    %v645 = vpop.f32.mrf.mxu0
    %646 = vmatprep.mubr.f32.mxu0 0.0
    %647 = vmatmul.mubr.f32.gmra.mxu0 %v575
    %v648 = vpop.f32.mrf.mxu0
    %v649 = vadd.f32 %v568, %v648
    %v650 = vpop.f32.mrf.mxu0
    %651 = vdwg.mxu0
    %v652 = vmul.f32 %v644, 0.01
    %v653 = vmul.f32 %v649, 0.01
    %v654 = vmax.f32 %v644, %v652
    %v655 = vmax.f32 %v649, %v653
    %v656 = vld [vmem:[%s7] sm:$0xff]
    %v657 = vld [vmem:[%s8] sm:$0xff]
    %659 = vset.pattern.permute.xlu0 0
    %660 = vperm.xlu0 %659, %v657
    %v661 = vpop.permute.xlu0 %660
    %vm663 = vcmask 130048
    %v665 = vsel %vm663, %v656, 0
    %667 = vmatprep.subr.mxu0 0.0
    %668 = vmatpush1.msra.mxu0 0.0
    %669 = vmatprep.subr.mxu0 0.0
    %670 = vmatpush1.msra.mxu0 0.0
    %671 = vmatprep.subr.mxu0 0.0
    %672 = vmatpush1.msra.mxu0 0.0
    %673 = vmatprep.subr.mxu0 0.0
    %674 = vmatpush1.msra.mxu0 0.0
    %675 = vmatprep.subr.mxu0 0.0
    %676 = vmatpush1.msra.mxu0 0.0
    %677 = vmatprep.subr.mxu0 0.0
    %678 = vmatpush1.msra.mxu0 0.0
    %679 = vmatprep.subr.mxu0 0.0
    %680 = vmatpush1.msra.mxu0 0.0
    %681 = vmatprep.subr.mxu0 0.0
    %682 = vmatpush1.msra.mxu0 0.0
    %683 = vmatprep.subr.mxu0 0.0
    %684 = vmatpush1.msra.mxu0 0.0
    %685 = vmatprep.subr.mxu0 0.0
    %686 = vmatpush1.msra.mxu0 0.0
    %687 = vmatprep.subr.mxu0 0.0
    %688 = vmatpush1.msra.mxu0 0.0
    %689 = vmatprep.subr.mxu0 0.0
    %690 = vmatpush1.msra.mxu0 0.0
    %691 = vmatprep.subr.mxu0 0.0
    %692 = vmatpush1.msra.mxu0 0.0
    %693 = vmatprep.subr.mxu0 0.0
    %694 = vmatpush1.msra.mxu0 0.0
    %695 = vmatprep.subr.mxu0 0.0
    %696 = vmatpush1.msra.mxu0 %v655
    %697 = vmatprep.subr.mxu0 0.0
    %698 = vmatpush1.msra.mxu0 %v654
    %699 = vmatprep.subr.mxu0 0.0
    %700 = vmatpush2.msra.mxu0 0.0
    %701 = vmatprep.subr.mxu0 0.0
    %702 = vmatpush2.msra.mxu0 0.0
    %703 = vmatprep.subr.mxu0 0.0
    %704 = vmatpush2.msra.mxu0 0.0
    %705 = vmatprep.subr.mxu0 0.0
    %706 = vmatpush2.msra.mxu0 0.0
    %707 = vmatprep.subr.mxu0 0.0
    %708 = vmatpush2.msra.mxu0 0.0
    %709 = vmatprep.subr.mxu0 0.0
    %710 = vmatpush2.msra.mxu0 0.0
    %711 = vmatprep.subr.mxu0 0.0
    %712 = vmatpush2.msra.mxu0 0.0
    %713 = vmatprep.subr.mxu0 0.0
    %714 = vmatpush2.msra.mxu0 0.0
    %715 = vmatprep.subr.mxu0 0.0
    %716 = vmatpush2.msra.mxu0 0.0
    %717 = vmatprep.subr.mxu0 0.0
    %718 = vmatpush2.msra.mxu0 0.0
    %719 = vmatprep.subr.mxu0 0.0
    %720 = vmatpush2.msra.mxu0 0.0
    %721 = vmatprep.subr.mxu0 0.0
    %722 = vmatpush2.msra.mxu0 0.0
    %723 = vmatprep.subr.mxu0 0.0
    %724 = vmatpush2.msra.mxu0 0.0
    %725 = vmatprep.subr.mxu0 0.0
    %726 = vmatpush2.msra.mxu0 0.0
    %727 = vmatprep.subr.mxu0 0.0
    %728 = vmatpush2.msra.mxu0 0.0
    %729 = vmatprep.subr.mxu0 0.0
    %730 = vmatpush2.msra.mxu0 0.0
    %731 = vmatprep.mubr.f32.mxu0 0.0
    %732 = vmatmul.mubr.f32.gmra.mxu0 %v665
    %v733 = vpop.f32.mrf.mxu0
    %v734 = vadd.f32 %v661, %v733
    %v735 = vpop.f32.mrf.mxu0
    %736 = vdwg.mxu0
    %v737 = vmul.f32 %v734, %v734
    %v738 = vrot.slane %v737, 4
    %v739 = vadd.f32 %v737, %v738
    %v740 = vrot.slane %v739, 2
    %v741 = vadd.f32 %v739, %v740
    %v742 = vrot.slane %v741, 1
    %v743 = vadd.f32 %v741, %v742
    %v744 = vmax.f32 %v743, 1e-24
    %v745 = vrsqrt.pop %v744
    %v746 = vmul.f32 %v734, %v745
    %747 = vst [vmem:[#allocation2] sm:$0xff] %v746
    // Predicated region
    $region38: #{tpu_custom_call.1} parent=1 // pred_check
      _
    $region39: #{tpu_custom_call.1} parent=1 // pred_check_branch
      %749 = sbr.rel (0) target = $region41
    $region40: #{tpu_custom_call.1} parent=1 // pred_region
      %s751 = ssub.s32 128, 128
      %752 = vsyncadd [#allocation3], %s751
      %s754 = sshll.u32 [#allocation2], 4
      %s755 = int_to_ptr.vmem [resolvable:$true] %s754
      %757 = dma.vmem_to_hbm [thread:$0]  %s755, 128, %s9, [#allocation3]
    $region41: #{tpu_custom_call.1} parent=1 // pred_fallthru
      _
    // Predicated region
    $region42: #{tpu_custom_call.1} parent=1 // pred_check
      _
    $region43: #{tpu_custom_call.1} parent=1 // pred_check_branch
      %759 = sbr.rel (0) target = $region45
    $region44: #{tpu_custom_call.1} parent=1 // pred_region
      %760 = dma.done [#allocation3], 128
    $region45: #{tpu_custom_call.1} parent=1 // pred_fallthru
      _
    %761 = vsyncpa [#allocation3], 1

</llo_original>
